<compile_context>
chip_gen: v7x
topology: tpu7x:2x2x1
jax: 0.10.0
libtpu: 0.0.40
codegen_flags: <defaults>
</compile_context>

<pallas_src>
import jax
import jax.numpy as jnp
from jax import lax
from jax.experimental import pallas as pl
from jax.experimental.pallas import tpu as pltpu


def _round_up(x, m):
    return (x + m - 1) // m * m


def _tpu_generation():
    """Best-effort TPU generation (5/6/7); defaults to 6 if unknown."""
    try:
        kind = jax.devices()[0].device_kind.lower()
    except Exception:
        kind = ""
    for g in (7, 6, 5):
        if f"v{g}" in kind:
            return g
    return 6


def _linear_relu_kernel(x_ref, w_ref, b_ref, o_ref):
    # x_ref: (tm, K)   w_ref: (K, tn)   b_ref: (1, tn)   o_ref: (tm, tn)
    y = lax.dot_general(
        x_ref[...], w_ref[...],
        dimension_numbers=(((1,), (0,)), ((), ())),   # plain (M,K)x(K,N)
        preferred_element_type=jnp.float32,           # f32 MXU accumulation
    )
    y = y + b_ref[...].astype(jnp.float32)            # f32 epilogue (v5e-safe)
    o_ref[...] = jnp.maximum(y, 0.0).astype(o_ref.dtype)


def prepare_params(weight, bias):
    """One-time parameter prep (hoisted out of the per-call path).

    Pads shared_dim up to a multiple of 128 (lane-dense output stores) and
    transposes the PyTorch (shared_dim, input_dim) weight to (input_dim, Np)
    so the kernel sees the MXU-native (M,K)x(K,N) layout.

    Returns (w_t, bias2d, shared_dim); reuse these across forward calls.
    """
    shared_dim, input_dim = weight.shape
    assert bias.shape == (shared_dim,)
    n_pad = (-shared_dim) % 128
    if n_pad:
        weight = jnp.pad(weight, ((0, n_pad), (0, 0)))
        bias = jnp.pad(bias, (0, n_pad))
    w_t = jnp.asarray(weight.T)                    # (input_dim, Np), one-time copy
    b2d = bias.reshape(1, shared_dim + n_pad)
    return w_t, b2d, shared_dim


def shared_feature_extractor_prepped(x, w_t, b2d, shared_dim, *, block_m=None):
    """relu(x @ W^T + b) with pre-transposed/padded params from prepare_params."""
    batch, input_dim = x.shape
    k, n = w_t.shape
    assert k == input_dim, "weight inner dim must match x feature dim"

    gen = _tpu_generation()
    x_elt = x.dtype.itemsize
    w_elt = w_t.dtype.itemsize
    sub = max(8, 32 // max(x_elt, 1))        # sublane multiple: 8 f32, 16 bf16
    mxu_n = 128 if gen <= 5 else 256         # MXU width for N tiling

    # ---- batch tile (tm) ---------------------------------------------------
    if block_m is None:
        # v7x has 64 MiB VMEM: shrink f32 tiles; keep 512 elsewhere / for bf16.
        block_m = 256 if (gen >= 7 and x_elt >= 4) else 512
    if batch > block_m:
        tm = block_m                                     # sublane-aligned
    elif gen >= 7 and batch >= 2 * sub:
        # 2 TensorCores/chip: ensure the "parallel" batch axis has >= 2 steps.
        tm = min(block_m, _round_up(pl.cdiv(batch, 2), sub))
    else:
        tm = batch                                       # full dim: always legal
    grid_m = pl.cdiv(batch, tm)

    # ---- N tile (tn): keep the full weight resident unless it blows VMEM ---
    weight_budget = (40 << 20) if gen >= 7 else (80 << 20)
    if input_dim * n * w_elt <= weight_budget:
        tn = n
    else:
        tn = max(mxu_n, (weight_budget // (input_dim * w_elt)) // mxu_n * mxu_n)
    grid_n = pl.cdiv(n, tn)

    # Constant index_map when grid_n == 1 -> single-buffer the resident weight.
    wb_buffers = 1 if grid_n == 1 else 2
    wb_mode = pl.Buffered(wb_buffers)

    # ---- scoped-VMEM budget (resident weight + double-buffered x/out) ------
    buf_bytes = (wb_buffers * (input_dim * tn * w_elt + 8 * tn * b2d.dtype.itemsize)
                 + 2 * tm * input_dim * x_elt
                 + 2 * tm * tn * x_elt)
    vmem_cap = (64 << 20) if gen >= 7 else (128 << 20)
    vmem_limit = min(max(int(1.25 * buf_bytes) + (4 << 20), 16 << 20), vmem_cap)

    w_reads = 1 if grid_n == 1 else grid_m   # weight re-fetched per batch tile only if N is tiled
    cost = pl.CostEstimate(
        flops=2 * batch * input_dim * n,
        transcendentals=0,
        bytes_accessed=(batch * input_dim * x_elt
                        + w_reads * n * input_dim * w_elt
                        + n * b2d.dtype.itemsize
                        + batch * n * x_elt),
    )

    out = pl.pallas_call(
        _linear_relu_kernel,
        out_shape=jax.ShapeDtypeStruct((batch, n), x.dtype),
        grid_spec=pltpu.PrefetchScalarGridSpec(
            num_scalar_prefetch=0,
            grid=(grid_m, grid_n),
            in_specs=[
                pl.BlockSpec((tm, input_dim), lambda i, j: (i, 0)),      # x tile
                pl.BlockSpec((input_dim, tn), lambda i, j: (0, j),       # weight
                             pipeline_mode=wb_mode),
                pl.BlockSpec((1, tn), lambda i, j: (0, j),               # bias row
                             pipeline_mode=wb_mode),
            ],
            out_specs=pl.BlockSpec((tm, tn), lambda i, j: (i, j)),
        ),
        compiler_params=pltpu.CompilerParams(
            dimension_semantics=("parallel", "parallel"),
            vmem_limit_bytes=vmem_limit,
        ),
        cost_estimate=cost,
    )(x, w_t, b2d)

    if n != shared_dim:
        out = out[:, :shared_dim]
    return out
    # TODO(synk): add a K grid axis with an f32 VMEM accumulator only if
    # input_dim itself ever overflows the per-tile VMEM budget.


def shared_feature_extractor(x, weight, bias, *, block_m=None):
    """One-shot convenience (preps params every call).

    For repeated forward passes, call prepare_params() once and use
    shared_feature_extractor_prepped() to avoid re-padding/transposing the
    weight in HBM on every call.
    """
    w_t, b2d, shared_dim = prepare_params(weight, bias)
    return shared_feature_extractor_prepped(x, w_t, b2d, shared_dim, block_m=block_m)


if __name__ == "__main__":
    key = jax.random.PRNGKey(0)
    kx, kw, kb, kx2 = jax.random.split(key, 4)

    # Shapes consistent with the module: Linear(input_dim=32 -> shared_dim=64), batch=8.
    batch, input_dim, shared_dim = 8, 32, 64
    x = jax.random.normal(kx, (batch, input_dim), dtype=jnp.float32)
    bound = 1.0 / (input_dim ** 0.5)
    weight = jax.random.uniform(kw, (shared_dim, input_dim),
                                minval=-bound, maxval=bound, dtype=jnp.float32)
    bias = jax.random.uniform(kb, (shared_dim,),
                              minval=-bound, maxval=bound, dtype=jnp.float32)

    # Prep once (pad + transpose), then run the hot path.
    w_t, b2d, sd = prepare_params(weight, bias)
    out = jax.block_until_ready(shared_feature_extractor_prepped(x, w_t, b2d, sd))
    ref = jnp.maximum(x @ weight.T + bias, 0.0)
    assert out.shape == (batch, shared_dim)
    assert jnp.allclose(out, ref, atol=1e-5, rtol=1e-5)

    # Ragged / split batch (exercises multi-tile batch axis + padded-N slice).
    x2 = jax.random.normal(kx2, (300, input_dim), dtype=jnp.float32)
    out2 = jax.block_until_ready(
        shared_feature_extractor_prepped(x2, w_t, b2d, sd))
    ref2 = jnp.maximum(x2 @ weight.T + bias, 0.0)
    assert out2.shape == (300, shared_dim)
    assert jnp.allclose(out2, ref2, atol=1e-5, rtol=1e-5)

    # bf16 fast path (halves HBM traffic on v6e/v7x; f32 MXU accumulation inside).
    out_bf16 = jax.block_until_ready(shared_feature_extractor(
        x.astype(jnp.bfloat16), weight.astype(jnp.bfloat16),
        bias.astype(jnp.bfloat16)))
    assert jnp.allclose(out_bf16.astype(jnp.float32), ref, atol=5e-2, rtol=5e-2)

    print("KERNEL_OK")
</pallas_src>

<mosaic_0001>
module attributes {stable_mosaic.version = 11 : i64} {
  func.func @_linear_relu_kernel(%arg0: i32, %arg1: i32, %arg2: memref<8x32xf32, #tpu.memory_space<vmem>>, %arg3: memref<32x128xf32, #tpu.memory_space<vmem>>, %arg4: memref<1x128xf32, #tpu.memory_space<vmem>>, %arg5: memref<8x128xf32, #tpu.memory_space<vmem>>) attributes {dimension_semantics = [#tpu.dimension_semantics<parallel>, #tpu.dimension_semantics<parallel>], iteration_bounds = array<i64: 1, 1>, scalar_prefetch = 0 : i64, scratch_operands = 0 : i64, tpu.core_type = #tpu.core_type<tc>, window_params = [{transform_indices = @transform_0, window_bounds = array<i64: 8, 32>}, {pipeline_mode = #tpu.pipeline_mode<synchronous>, transform_indices = @transform_1, window_bounds = array<i64: 32, 128>}, {pipeline_mode = #tpu.pipeline_mode<synchronous>, transform_indices = @transform_2, window_bounds = array<i64: 1, 128>}, {transform_indices = @transform_3, window_bounds = array<i64: 8, 128>}]} {
    %c0 = arith.constant 0 : index
    %c0_0 = arith.constant 0 : index
    %0 = vector.load %arg2[%c0, %c0_0] : memref<8x32xf32, #tpu.memory_space<vmem>>, vector<8x32xf32>
    %c0_1 = arith.constant 0 : index
    %c0_2 = arith.constant 0 : index
    %1 = vector.load %arg3[%c0_1, %c0_2] : memref<32x128xf32, #tpu.memory_space<vmem>>, vector<32x128xf32>
    %cst = arith.constant dense<0.000000e+00> : vector<8x128xf32>
    %2 = tpu.matmul %0, %1, %cst {dimension_numbers = #tpu.dot_dimension_numbers<[1], [0], [0], [1], [0, 0, 1, 1], [], []>} : vector<8x32xf32>, vector<32x128xf32>, vector<8x128xf32> -> vector<8x128xf32>
    %c0_3 = arith.constant 0 : index
    %c0_4 = arith.constant 0 : index
    %3 = vector.load %arg4[%c0_3, %c0_4] : memref<1x128xf32, #tpu.memory_space<vmem>>, vector<1x128xf32>
    %4 = vector.broadcast %3 : vector<1x128xf32> to vector<8x128xf32>
    %5 = arith.addf %2, %4 : vector<8x128xf32>
    %cst_5 = arith.constant 0.000000e+00 : f32
    %6 = vector.broadcast %cst_5 : f32 to vector<8x128xf32>
    %7 = arith.maximumf %5, %6 : vector<8x128xf32>
    %c0_6 = arith.constant 0 : index
    %c0_7 = arith.constant 0 : index
    %8 = vector.load %arg5[%c0_6, %c0_7] : memref<8x128xf32, #tpu.memory_space<vmem>>, vector<8x128xf32>
    tpu.vector_store %arg5[%c0_6, %c0_7], %7 {strides = array<i32>} : memref<8x128xf32, #tpu.memory_space<vmem>>, vector<8x128xf32>,
    return
  }
  func.func @transform_0(%arg0: i32, %arg1: i32) -> (i32, i32) {
    %c0_i32 = arith.constant 0 : i32
    %c0_i32_0 = arith.constant 0 : i32
    return %arg0, %c0_i32 : i32, i32
  }
  func.func @transform_1(%arg0: i32, %arg1: i32) -> (i32, i32) {
    %c0_i32 = arith.constant 0 : i32
    %c0_i32_0 = arith.constant 0 : i32
    return %c0_i32, %arg1 : i32, i32
  }
  func.func @transform_2(%arg0: i32, %arg1: i32) -> (i32, i32) {
    %c0_i32 = arith.constant 0 : i32
    %c0_i32_0 = arith.constant 0 : i32
    return %c0_i32, %arg1 : i32, i32
  }
  func.func @transform_3(%arg0: i32, %arg1: i32) -> (i32, i32) {
    %c0_i32 = arith.constant 0 : i32
    return %arg0, %arg1 : i32, i32
  }
}

</mosaic_0001>

<llo_original>
// kernel: tpu_custom_call.1
$region0: #{tpu_custom_call.1}
  #allocation0 [shape = 'u32[]', space=smem, size = 0x4, offset = 0x4, fixed_abs, tag = 'smem constant byte address 0x4 - core index']
  #allocation1 [shape = 'u32[144,128]{1,0:T(1,128)}', space=vmem, size = 0x12000, scoped, tag = 'internal scratch']
  %s0 = inlined_call_operand.hbm [shape: f32[8,32], index: 0, kind: input, shape index: {}]
  %s1 = inlined_call_operand.hbm [shape: f32[32,128], index: 1, kind: input, shape index: {}]
  %s2 = inlined_call_operand.vmem [shape: f32[1,128], index: 2, kind: input, shape index: {}]
  %s3 = inlined_call_operand.hbm [shape: f32[8,128], index: 3, kind: output, shape index: {}]
  %s4 = sld [smem:[#allocation0]]
  $region30: #{tpu_custom_call.1} parent=0
    _
  %s6 = ssub.s32 1, %s4
  %s7 = scalar_select 0, %s6, %s4
  $region1: #{tpu_custom_call.1} parent=0
    #allocation2 [shape = 'u8[4096]{0}', space=vmem, size = 0x1000, scoped, tag = 'input window, operand 0, single buffered']
    #allocation3 [shape = 's32[1]{0}', space=sflag, size = 0x4, scoped, tag = 'scoped memory for tpu_custom_call.1']
    #allocation4 [shape = 's32[1]{0}', space=sflag, size = 0x4, scoped, tag = 'scoped memory for tpu_custom_call.1']
    #allocation5 [shape = 'u8[16384]{0}', space=vmem, size = 0x4000, scoped, tag = 'input window, operand 1, single buffered']
    #allocation6 [shape = 's32[1]{0}', space=sflag, size = 0x4, scoped, tag = 'scoped memory for tpu_custom_call.1']
    #allocation7 [shape = 'u8[4096]{0}', space=vmem, size = 0x1000, scoped, tag = 'output window, operand 0, single buffered']
    %8 = vsyncpa [#allocation3], 0
    %9 = vsyncpa [#allocation6], 0
    %10 = vsyncpa [#allocation4], 0
    // Predicated region
    $region2: #{tpu_custom_call.1} parent=1 // pred_check
      _
    $region3: #{tpu_custom_call.1} parent=1 // pred_check_branch
      %12 = sbr.rel (0) target = $region5
    $region4: #{tpu_custom_call.1} parent=1 // pred_region
      %s14 = ssub.s32 128, 128
      %15 = vsyncadd [#allocation3], %s14
      %s17 = sshll.u32 [#allocation2], 4
      %s18 = int_to_ptr.vmem [resolvable:$true] %s17
      %20 = dma.hbm_to_vmem [thread:$0]  %s0, 128, %s18, [#allocation3]
    $region5: #{tpu_custom_call.1} parent=1 // pred_fallthru
      _
    // Predicated region
    $region6: #{tpu_custom_call.1} parent=1 // pred_check
      _
    $region7: #{tpu_custom_call.1} parent=1 // pred_check_branch
      %22 = sbr.rel (0) target = $region9
    $region8: #{tpu_custom_call.1} parent=1 // pred_region
      %s24 = ssub.s32 512, 512
      %25 = vsyncadd [#allocation6], %s24
      %s26 = sshll.u32 [#allocation5], 4
      %s27 = int_to_ptr.vmem [resolvable:$true] %s26
      %32 = dma.hbm_to_vmem [thread:$0]  %s1, 512, %s27, [#allocation6], 128, 128, 8
    $region9: #{tpu_custom_call.1} parent=1 // pred_fallthru
      _
    // Predicated region
    $region10: #{tpu_custom_call.1} parent=1 // pred_check
      _
    $region11: #{tpu_custom_call.1} parent=1 // pred_check_branch
      %34 = sbr.rel (0) target = $region13
    $region12: #{tpu_custom_call.1} parent=1 // pred_region
      _
    $region13: #{tpu_custom_call.1} parent=1 // pred_fallthru
      _
    // Predicated region
    $region14: #{tpu_custom_call.1} parent=1 // pred_check
      _
    $region15: #{tpu_custom_call.1} parent=1 // pred_check_branch
      %36 = sbr.rel (0) target = $region17
    $region16: #{tpu_custom_call.1} parent=1 // pred_region
      %37 = dma.done [#allocation3], 128
    $region17: #{tpu_custom_call.1} parent=1 // pred_fallthru
      _
    // Predicated region
    $region18: #{tpu_custom_call.1} parent=1 // pred_check
      _
    $region19: #{tpu_custom_call.1} parent=1 // pred_check_branch
      %39 = sbr.rel (0) target = $region21
    $region20: #{tpu_custom_call.1} parent=1 // pred_region
      %40 = dma.done [#allocation6], 512
    $region21: #{tpu_custom_call.1} parent=1 // pred_fallthru
      _
    %v41 = vld [vmem:[#allocation2] sm:$0xff]
    %v42 = vld [vmem:[#allocation5] sm:$0xff]
    %v43 = vld [vmem:[#allocation5 + $0x8] sm:$0xff]
    %v44 = vld [vmem:[#allocation5 + $0x10] sm:$0xff]
    %v45 = vld [vmem:[#allocation5 + $0x18] sm:$0xff]
    %v46 = vld [vmem:[%s2] sm:$0x1]
    %v48 = vlaneseq
    %v49 = vshrl.u32 %v48, 7
    %v50 = vsub.s32 0, %v49
    %v51 = vrot.slane %v46, %v50
    %vm53 = vcmask 261120
    %v55 = vsel %vm53, %v41, 0
    %57 = vmatprep.subr.mxu0 0.0
    %58 = vmatpush1.msra.mxu0 %v42
    %59 = vmatprep.subr.mxu0 0.0
    %60 = vmatpush1.msra.mxu0 %v43
    %61 = vmatprep.subr.mxu0 0.0
    %62 = vmatpush1.msra.mxu0 %v44
    %63 = vmatprep.subr.mxu0 0.0
    %64 = vmatpush1.msra.mxu0 %v45
    %65 = vmatprep.subr.mxu0 0.0
    %66 = vmatpush1.msra.mxu0 0.0
    %67 = vmatprep.subr.mxu0 0.0
    %68 = vmatpush1.msra.mxu0 0.0
    %69 = vmatprep.subr.mxu0 0.0
    %70 = vmatpush1.msra.mxu0 0.0
    %71 = vmatprep.subr.mxu0 0.0
    %72 = vmatpush1.msra.mxu0 0.0
    %73 = vmatprep.subr.mxu0 0.0
    %74 = vmatpush1.msra.mxu0 0.0
    %75 = vmatprep.subr.mxu0 0.0
    %76 = vmatpush1.msra.mxu0 0.0
    %77 = vmatprep.subr.mxu0 0.0
    %78 = vmatpush1.msra.mxu0 0.0
    %79 = vmatprep.subr.mxu0 0.0
    %80 = vmatpush1.msra.mxu0 0.0
    %81 = vmatprep.subr.mxu0 0.0
    %82 = vmatpush1.msra.mxu0 0.0
    %83 = vmatprep.subr.mxu0 0.0
    %84 = vmatpush1.msra.mxu0 0.0
    %85 = vmatprep.subr.mxu0 0.0
    %86 = vmatpush1.msra.mxu0 0.0
    %87 = vmatprep.subr.mxu0 0.0
    %88 = vmatpush1.msra.mxu0 0.0
    %89 = vmatprep.subr.mxu0 0.0
    %90 = vmatpush1.msra.mxu0 0.0
    %91 = vmatprep.subr.mxu0 0.0
    %92 = vmatpush1.msra.mxu0 0.0
    %93 = vmatprep.subr.mxu0 0.0
    %94 = vmatpush1.msra.mxu0 0.0
    %95 = vmatprep.subr.mxu0 0.0
    %96 = vmatpush1.msra.mxu0 0.0
    %97 = vmatprep.subr.mxu0 0.0
    %98 = vmatpush1.msra.mxu0 0.0
    %99 = vmatprep.subr.mxu0 0.0
    %100 = vmatpush1.msra.mxu0 0.0
    %101 = vmatprep.subr.mxu0 0.0
    %102 = vmatpush1.msra.mxu0 0.0
    %103 = vmatprep.subr.mxu0 0.0
    %104 = vmatpush1.msra.mxu0 0.0
    %105 = vmatprep.subr.mxu0 0.0
    %106 = vmatpush1.msra.mxu0 0.0
    %107 = vmatprep.subr.mxu0 0.0
    %108 = vmatpush1.msra.mxu0 0.0
    %109 = vmatprep.subr.mxu0 0.0
    %110 = vmatpush1.msra.mxu0 0.0
    %111 = vmatprep.subr.mxu0 0.0
    %112 = vmatpush1.msra.mxu0 0.0
    %113 = vmatprep.subr.mxu0 0.0
    %114 = vmatpush1.msra.mxu0 0.0
    %115 = vmatprep.subr.mxu0 0.0
    %116 = vmatpush1.msra.mxu0 0.0
    %117 = vmatprep.subr.mxu0 0.0
    %118 = vmatpush1.msra.mxu0 0.0
    %119 = vmatprep.subr.mxu0 0.0
    %120 = vmatpush1.msra.mxu0 0.0
    %121 = vmatprep.mubr.f32.mxu0 0.0
    %122 = vmatmul.mubr.f32.gmra.mrb[0].mxu0 %v55
    %v123 = vpop.f32.mrb[0].mxu0
    %v124 = vadd.f32 %v51, %v123
    %v125 = vpop.f32.mrb[0].mxu0
    %126 = vdwg.mxu0
    %v127 = vmax.f32 %v124, 0.0
    %128 = vst [vmem:[#allocation7] sm:$0xff] %v127
    // Predicated region
    $region22: #{tpu_custom_call.1} parent=1 // pred_check
      _
    $region23: #{tpu_custom_call.1} parent=1 // pred_check_branch
      %130 = sbr.rel (0) target = $region25
    $region24: #{tpu_custom_call.1} parent=1 // pred_region
      %s132 = ssub.s32 128, 128
      %133 = vsyncadd [#allocation4], %s132
      %s135 = sshll.u32 [#allocation7], 4
      %s136 = int_to_ptr.vmem [resolvable:$true] %s135
      %138 = dma.vmem_to_hbm [thread:$0]  %s136, 128, %s3, [#allocation4]
    $region25: #{tpu_custom_call.1} parent=1 // pred_fallthru
      _
    // Predicated region
    $region26: #{tpu_custom_call.1} parent=1 // pred_check
      _
    $region27: #{tpu_custom_call.1} parent=1 // pred_check_branch
      %140 = sbr.rel (0) target = $region29
    $region28: #{tpu_custom_call.1} parent=1 // pred_region
      %141 = dma.done [#allocation4], 128
    $region29: #{tpu_custom_call.1} parent=1 // pred_fallthru
      _
    %142 = vsyncpa [#allocation3], 1
    %143 = vsyncpa [#allocation6], 1
    %144 = vsyncpa [#allocation4], 1

</llo_original>
